<compile_context>
chip_gen: v7x
topology: tpu7x:2x2x1
jax: 0.10.0
libtpu: 0.0.40
codegen_flags: <defaults>
</compile_context>

<pallas_src>
import jax
import jax.numpy as jnp
from jax.experimental import pallas as pl
from jax.experimental.pallas import tpu as pltpu


def _round_up(n, m):
    return ((n + m - 1) // m) * m


def regressor_kernel(xt_ref, w1_ref, b1_ref, w2_ref, b2_ref, w3_ref, b3_ref, o_ref):
    # xt_ref: (13, TILE_B) bf16 ; weights in torch layout (out, in) bf16 ;
    # biases (out, 1) f32 broadcast over the lane (batch) axis.
    xt = xt_ref[...]

    # fc1 + ReLU: (50, 13) @ (13, TILE_B) -> (50, TILE_B)
    h1 = jnp.dot(w1_ref[...], xt, preferred_element_type=jnp.float32) + b1_ref[...]
    h1 = jnp.maximum(h1, 0.0)

    # fc2 + ReLU (+ dropout as identity in eval mode): -> (30, TILE_B)
    h2 = jnp.dot(w2_ref[...], h1.astype(w2_ref.dtype),
                 preferred_element_type=jnp.float32) + b2_ref[...]
    h2 = jnp.maximum(h2, 0.0)

    # fc3 + ReLU: (1, 30) @ (30, TILE_B) -> (1, TILE_B)  (lane-dense result row)
    h3 = jnp.dot(w3_ref[...], h2.astype(w3_ref.dtype),
                 preferred_element_type=jnp.float32) + b3_ref[...]
    o_ref[...] = jnp.maximum(h3, 0.0).astype(o_ref.dtype)


def regressor_forward(x, params, *, tile_b=1024):
    """x: (B, 13) f32. Returns (B, 1) f32, matching the PyTorch module."""
    w1, b1, w2, b2, w3, b3 = params  # torch layout: w (out, in), b (out, 1)
    B = x.shape[0]

    # Batch tile: multiple of 128 (lane width), capped so tiny batches pad to 128.
    tile_b = max(128, _round_up(min(tile_b, _round_up(B, 128)), 128))
    B_pad = _round_up(B, tile_b)
    grid = (B_pad // tile_b,)

    # Pad batch, transpose to (13, B_pad), feed x / weights as bf16.
    x_pad = jnp.pad(x, ((0, B_pad - B), (0, 0)))
    xt = x_pad.T.astype(jnp.bfloat16)
    w1b = w1.astype(jnp.bfloat16)
    w2b = w2.astype(jnp.bfloat16)
    w3b = w3.astype(jnp.bfloat16)

    out = pl.pallas_call(
        regressor_kernel,
        out_shape=jax.ShapeDtypeStruct((1, B_pad), jnp.float32),
        grid_spec=pltpu.PrefetchScalarGridSpec(
            num_scalar_prefetch=0,
            grid=grid,
            in_specs=[
                # x tile marches along the batch (lane) axis.
                pl.BlockSpec((13, tile_b), lambda i: (0, i)),
                # Weights / biases: same block every step -> VMEM-resident.
                pl.BlockSpec(w1b.shape, lambda i: (0, 0)),
                pl.BlockSpec(b1.shape, lambda i: (0, 0)),
                pl.BlockSpec(w2b.shape, lambda i: (0, 0)),
                pl.BlockSpec(b2.shape, lambda i: (0, 0)),
                pl.BlockSpec(w3b.shape, lambda i: (0, 0)),
                pl.BlockSpec(b3.shape, lambda i: (0, 0)),
            ],
            out_specs=pl.BlockSpec((1, tile_b), lambda i: (0, i)),
        ),
        compiler_params=pltpu.CompilerParams(
            dimension_semantics=("parallel",),
        ),
    )(xt, w1b, b1, w2b, b2, w3b, b3)

    # (1, B_pad) lane-dense kernel output -> (B, 1) module output.
    return out[0, :B].reshape(B, 1)


def init_params(key):
    # Mimics PyTorch Linear's U(-1/sqrt(fan_in), 1/sqrt(fan_in)); weights stored
    # in torch layout [out_features, in_features], biases as [out_features, 1].
    def linear(key, fan_in, fan_out):
        kw, kb = jax.random.split(key)
        bound = 1.0 / jnp.sqrt(float(fan_in))
        w = jax.random.uniform(kw, (fan_out, fan_in), jnp.float32, -bound, bound)
        b = jax.random.uniform(kb, (fan_out, 1), jnp.float32, -bound, bound)
        return w, b

    k1, k2, k3 = jax.random.split(key, 3)
    w1, b1 = linear(k1, 13, 50)
    w2, b2 = linear(k2, 50, 30)
    w3, b3 = linear(k3, 30, 1)
    return w1, b1, w2, b2, w3, b3


def _reference(x, params):
    # Plain-JAX reference that mirrors the kernel's bf16-input / f32-accumulate
    # numerics (dropout = identity in eval mode).
    w1, b1, w2, b2, w3, b3 = params
    f32 = lambda a: a.astype(jnp.bfloat16).astype(jnp.float32)
    h1 = jnp.maximum(f32(x) @ f32(w1).T + b1.T, 0.0)
    h2 = jnp.maximum(f32(h1) @ f32(w2).T + b2.T, 0.0)
    h3 = jnp.maximum(f32(h2) @ f32(w3).T + b3.T, 0.0)
    return h3


if __name__ == "__main__":
    key = jax.random.PRNGKey(0)
    kx, kp = jax.random.split(key)
    params = init_params(kp)

    # Small batch (pads to one 128-wide tile).
    B = 8
    x = jax.random.normal(kx, (B, 13), dtype=jnp.float32)
    out = regressor_forward(x, params)
    jax.block_until_ready(out)
    ref = _reference(x, params)
    assert out.shape == (B, 1)
    assert jnp.allclose(out, ref, atol=2e-2, rtol=2e-2)

    # Non-multiple batch with a multi-step grid (exercises padding + resident weights).
    B2 = 300
    x2 = jax.random.normal(jax.random.PRNGKey(1), (B2, 13), dtype=jnp.float32)
    out2 = regressor_forward(x2, params, tile_b=128)
    jax.block_until_ready(out2)
    ref2 = _reference(x2, params)
    assert out2.shape == (B2, 1)
    assert jnp.allclose(out2, ref2, atol=2e-2, rtol=2e-2)

    print("KERNEL_OK")
</pallas_src>

<mosaic_0001>
module attributes {stable_mosaic.version = 11 : i64} {
  func.func @regressor_kernel(%arg0: i32, %arg1: memref<13x128xbf16, #tpu.memory_space<vmem>>, %arg2: memref<50x13xbf16, #tpu.memory_space<vmem>>, %arg3: memref<50x1xf32, #tpu.memory_space<vmem>>, %arg4: memref<30x50xbf16, #tpu.memory_space<vmem>>, %arg5: memref<30x1xf32, #tpu.memory_space<vmem>>, %arg6: memref<1x30xbf16, #tpu.memory_space<vmem>>, %arg7: memref<1x1xf32, #tpu.memory_space<vmem>>, %arg8: memref<1x128xf32, #tpu.memory_space<vmem>>) attributes {dimension_semantics = [#tpu.dimension_semantics<parallel>], iteration_bounds = array<i64: 1>, scalar_prefetch = 0 : i64, scratch_operands = 0 : i64, tpu.core_type = #tpu.core_type<tc>, window_params = [{transform_indices = @transform_0, window_bounds = array<i64: 13, 128>}, {pipeline_mode = #tpu.pipeline_mode<synchronous>, transform_indices = @transform_1, window_bounds = array<i64: 50, 13>}, {pipeline_mode = #tpu.pipeline_mode<synchronous>, transform_indices = @transform_2, window_bounds = array<i64: 50, 1>}, {pipeline_mode = #tpu.pipeline_mode<synchronous>, transform_indices = @transform_3, window_bounds = array<i64: 30, 50>}, {pipeline_mode = #tpu.pipeline_mode<synchronous>, transform_indices = @transform_4, window_bounds = array<i64: 30, 1>}, {pipeline_mode = #tpu.pipeline_mode<synchronous>, transform_indices = @transform_5, window_bounds = array<i64: 1, 30>}, {pipeline_mode = #tpu.pipeline_mode<synchronous>, transform_indices = @transform_6, window_bounds = array<i64: 1, 1>}, {transform_indices = @transform_7, window_bounds = array<i64: 1, 128>}]} {
    %c0 = arith.constant 0 : index
    %c0_0 = arith.constant 0 : index
    %0 = vector.load %arg1[%c0, %c0_0] : memref<13x128xbf16, #tpu.memory_space<vmem>>, vector<13x128xbf16>
    %c0_1 = arith.constant 0 : index
    %c0_2 = arith.constant 0 : index
    %1 = vector.load %arg2[%c0_1, %c0_2] : memref<50x13xbf16, #tpu.memory_space<vmem>>, vector<50x13xbf16>
    %cst = arith.constant dense<0.000000e+00> : vector<50x128xf32>
    %2 = tpu.matmul %1, %0, %cst {dimension_numbers = #tpu.dot_dimension_numbers<[1], [0], [0], [1], [0, 0, 1, 1], [], []>} : vector<50x13xbf16>, vector<13x128xbf16>, vector<50x128xf32> -> vector<50x128xf32>
    %c0_3 = arith.constant 0 : index
    %c0_4 = arith.constant 0 : index
    %3 = vector.load %arg3[%c0_3, %c0_4] : memref<50x1xf32, #tpu.memory_space<vmem>>, vector<50x1xf32>
    %4 = vector.broadcast %3 : vector<50x1xf32> to vector<50x128xf32>
    %5 = arith.addf %2, %4 : vector<50x128xf32>
    %cst_5 = arith.constant 0.000000e+00 : f32
    %6 = vector.broadcast %cst_5 : f32 to vector<50x128xf32>
    %7 = arith.maximumf %5, %6 : vector<50x128xf32>
    %c0_6 = arith.constant 0 : index
    %c0_7 = arith.constant 0 : index
    %8 = vector.load %arg4[%c0_6, %c0_7] : memref<30x50xbf16, #tpu.memory_space<vmem>>, vector<30x50xbf16>
    %9 = arith.truncf %7 : vector<50x128xf32> to vector<50x128xbf16>
    %cst_8 = arith.constant dense<0.000000e+00> : vector<30x128xf32>
    %10 = tpu.matmul %8, %9, %cst_8 {dimension_numbers = #tpu.dot_dimension_numbers<[1], [0], [0], [1], [0, 0, 1, 1], [], []>} : vector<30x50xbf16>, vector<50x128xbf16>, vector<30x128xf32> -> vector<30x128xf32>
    %c0_9 = arith.constant 0 : index
    %c0_10 = arith.constant 0 : index
    %11 = vector.load %arg5[%c0_9, %c0_10] : memref<30x1xf32, #tpu.memory_space<vmem>>, vector<30x1xf32>
    %12 = vector.broadcast %11 : vector<30x1xf32> to vector<30x128xf32>
    %13 = arith.addf %10, %12 : vector<30x128xf32>
    %cst_11 = arith.constant 0.000000e+00 : f32
    %14 = vector.broadcast %cst_11 : f32 to vector<30x128xf32>
    %15 = arith.maximumf %13, %14 : vector<30x128xf32>
    %c0_12 = arith.constant 0 : index
    %c0_13 = arith.constant 0 : index
    %16 = vector.load %arg6[%c0_12, %c0_13] : memref<1x30xbf16, #tpu.memory_space<vmem>>, vector<1x30xbf16>
    %17 = arith.truncf %15 : vector<30x128xf32> to vector<30x128xbf16>
    %cst_14 = arith.constant dense<0.000000e+00> : vector<1x128xf32>
    %18 = tpu.matmul %16, %17, %cst_14 {dimension_numbers = #tpu.dot_dimension_numbers<[1], [0], [0], [1], [0, 0, 1, 1], [], []>} : vector<1x30xbf16>, vector<30x128xbf16>, vector<1x128xf32> -> vector<1x128xf32>
    %c0_15 = arith.constant 0 : index
    %c0_16 = arith.constant 0 : index
    %19 = vector.load %arg7[%c0_15, %c0_16] : memref<1x1xf32, #tpu.memory_space<vmem>>, vector<1x1xf32>
    %20 = vector.broadcast %19 : vector<1x1xf32> to vector<1x128xf32>
    %21 = arith.addf %18, %20 : vector<1x128xf32>
    %cst_17 = arith.constant 0.000000e+00 : f32
    %22 = vector.broadcast %cst_17 : f32 to vector<1x128xf32>
    %23 = arith.maximumf %21, %22 : vector<1x128xf32>
    %c0_18 = arith.constant 0 : index
    %c0_19 = arith.constant 0 : index
    %24 = vector.load %arg8[%c0_18, %c0_19] : memref<1x128xf32, #tpu.memory_space<vmem>>, vector<1x128xf32>
    tpu.vector_store %arg8[%c0_18, %c0_19], %23 {strides = array<i32>} : memref<1x128xf32, #tpu.memory_space<vmem>>, vector<1x128xf32>,
    return
  }
  func.func @transform_0(%arg0: i32) -> (i32, i32) {
    %c0_i32 = arith.constant 0 : i32
    %c0_i32_0 = arith.constant 0 : i32
    return %c0_i32, %arg0 : i32, i32
  }
  func.func @transform_1(%arg0: i32) -> (i32, i32) {
    %c0_i32 = arith.constant 0 : i32
    %c0_i32_0 = arith.constant 0 : i32
    %c0_i32_1 = arith.constant 0 : i32
    return %c0_i32, %c0_i32_0 : i32, i32
  }
  func.func @transform_2(%arg0: i32) -> (i32, i32) {
    %c0_i32 = arith.constant 0 : i32
    %c0_i32_0 = arith.constant 0 : i32
    %c0_i32_1 = arith.constant 0 : i32
    return %c0_i32, %c0_i32_0 : i32, i32
  }
  func.func @transform_3(%arg0: i32) -> (i32, i32) {
    %c0_i32 = arith.constant 0 : i32
    %c0_i32_0 = arith.constant 0 : i32
    %c0_i32_1 = arith.constant 0 : i32
    return %c0_i32, %c0_i32_0 : i32, i32
  }
  func.func @transform_4(%arg0: i32) -> (i32, i32) {
    %c0_i32 = arith.constant 0 : i32
    %c0_i32_0 = arith.constant 0 : i32
    %c0_i32_1 = arith.constant 0 : i32
    return %c0_i32, %c0_i32_0 : i32, i32
  }
  func.func @transform_5(%arg0: i32) -> (i32, i32) {
    %c0_i32 = arith.constant 0 : i32
    %c0_i32_0 = arith.constant 0 : i32
    %c0_i32_1 = arith.constant 0 : i32
    return %c0_i32, %c0_i32_0 : i32, i32
  }
  func.func @transform_6(%arg0: i32) -> (i32, i32) {
    %c0_i32 = arith.constant 0 : i32
    %c0_i32_0 = arith.constant 0 : i32
    %c0_i32_1 = arith.constant 0 : i32
    return %c0_i32, %c0_i32_0 : i32, i32
  }
  func.func @transform_7(%arg0: i32) -> (i32, i32) {
    %c0_i32 = arith.constant 0 : i32
    %c0_i32_0 = arith.constant 0 : i32
    return %c0_i32, %arg0 : i32, i32
  }
}

</mosaic_0001>

<llo_original>
// kernel: tpu_custom_call.1
$region0: #{tpu_custom_call.1}
  #allocation0 [shape = 'u32[]', space=smem, size = 0x4, offset = 0x4, fixed_abs, tag = 'smem constant byte address 0x4 - core index']
  #allocation1 [shape = 'u32[144,128]{1,0:T(1,128)}', space=vmem, size = 0x12000, scoped, tag = 'internal scratch']
  #allocation2 [shape = 'f32[1,1]{1,0:T(1,128)S(1)}', space=vmem, size = 0x200, scoped, tag = 'scoped memory for tpu_custom_call.1']
  %s0 = inlined_call_operand.vmem [shape: bf16[13,128], index: 0, kind: input, shape index: {}]
  %s1 = inlined_call_operand.vmem [shape: bf16[50,13], index: 1, kind: input, shape index: {}]
  %s2 = inlined_call_operand.vmem [shape: f32[50,1], index: 2, kind: input, shape index: {}]
  %s3 = inlined_call_operand.vmem [shape: bf16[30,50], index: 3, kind: input, shape index: {}]
  %s4 = inlined_call_operand.vmem [shape: f32[30,1], index: 4, kind: input, shape index: {}]
  %s5 = inlined_call_operand.vmem [shape: bf16[1,30], index: 5, kind: input, shape index: {}]
  %s6 = inlined_call_operand.<no memory space> [shape: f32[1,1], index: 6, kind: input, shape index: {}]
  %s7 = inlined_call_operand.hbm [shape: f32[1,128], index: 7, kind: output, shape index: {}]
  %s8 = sld [smem:[#allocation0]]
  $region38: #{tpu_custom_call.1} parent=0
    _
  %s10 = ssub.s32 1, %s8
  %s11 = scalar_select 0, %s10, %s8
  %v12 = vstv %s6
  %13 = vst [vmem:[#allocation2] sm:$0x1] %v12
  $region1: #{tpu_custom_call.1} parent=0
    #allocation3 [shape = 'u8[512]{0}', space=vmem, size = 0x400, scoped, tag = 'output window, operand 0, single buffered']
    #allocation4 [shape = 's32[1]{0}', space=sflag, size = 0x4, scoped, tag = 'scoped memory for tpu_custom_call.1']
    %14 = vsyncpa [#allocation4], 0
    // Predicated region
    $region2: #{tpu_custom_call.1} parent=1 // pred_check
      _
    $region3: #{tpu_custom_call.1} parent=1 // pred_check_branch
      %16 = sbr.rel (0) target = $region5
    $region4: #{tpu_custom_call.1} parent=1 // pred_region
      _
    $region5: #{tpu_custom_call.1} parent=1 // pred_fallthru
      _
    // Predicated region
    $region6: #{tpu_custom_call.1} parent=1 // pred_check
      _
    $region7: #{tpu_custom_call.1} parent=1 // pred_check_branch
      %18 = sbr.rel (0) target = $region9
    $region8: #{tpu_custom_call.1} parent=1 // pred_region
      _
    $region9: #{tpu_custom_call.1} parent=1 // pred_fallthru
      _
    // Predicated region
    $region10: #{tpu_custom_call.1} parent=1 // pred_check
      _
    $region11: #{tpu_custom_call.1} parent=1 // pred_check_branch
      %20 = sbr.rel (0) target = $region13
    $region12: #{tpu_custom_call.1} parent=1 // pred_region
      _
    $region13: #{tpu_custom_call.1} parent=1 // pred_fallthru
      _
    // Predicated region
    $region14: #{tpu_custom_call.1} parent=1 // pred_check
      _
    $region15: #{tpu_custom_call.1} parent=1 // pred_check_branch
      %22 = sbr.rel (0) target = $region17
    $region16: #{tpu_custom_call.1} parent=1 // pred_region
      _
    $region17: #{tpu_custom_call.1} parent=1 // pred_fallthru
      _
    // Predicated region
    $region18: #{tpu_custom_call.1} parent=1 // pred_check
      _
    $region19: #{tpu_custom_call.1} parent=1 // pred_check_branch
      %24 = sbr.rel (0) target = $region21
    $region20: #{tpu_custom_call.1} parent=1 // pred_region
      _
    $region21: #{tpu_custom_call.1} parent=1 // pred_fallthru
      _
    // Predicated region
    $region22: #{tpu_custom_call.1} parent=1 // pred_check
      _
    $region23: #{tpu_custom_call.1} parent=1 // pred_check_branch
      %26 = sbr.rel (0) target = $region25
    $region24: #{tpu_custom_call.1} parent=1 // pred_region
      _
    $region25: #{tpu_custom_call.1} parent=1 // pred_fallthru
      _
    // Predicated region
    $region26: #{tpu_custom_call.1} parent=1 // pred_check
      _
    $region27: #{tpu_custom_call.1} parent=1 // pred_check_branch
      %28 = sbr.rel (0) target = $region29
    $region28: #{tpu_custom_call.1} parent=1 // pred_region
      _
    $region29: #{tpu_custom_call.1} parent=1 // pred_fallthru
      _
    %v30 = vld [vmem:[%s0] sm:$0xf]
    %v31 = vld [vmem:[%s0 + $0x4] sm:$0x7]
    %v32 = vld [vmem:[%s1] sm:$0xf]
    %v33 = vld [vmem:[%s1 + $0x4] sm:$0xf]
    %v34 = vld [vmem:[%s1 + $0x8] sm:$0xf]
    %v35 = vld [vmem:[%s1 + $0xc] sm:$0xf]
    %v36 = vld [vmem:[%s1 + $0x10] sm:$0xf]
    %v37 = vld [vmem:[%s1 + $0x14] sm:$0xf]
    %v38 = vld [vmem:[%s1 + $0x18] sm:$0x1]
    %v39 = vld [vmem:[%s2] sm:$0xff]
    %v40 = vld [vmem:[%s2 + $0x8] sm:$0xff]
    %v41 = vld [vmem:[%s2 + $0x10] sm:$0xff]
    %v42 = vld [vmem:[%s2 + $0x18] sm:$0xff]
    %v43 = vld [vmem:[%s2 + $0x20] sm:$0xff]
    %v44 = vld [vmem:[%s2 + $0x28] sm:$0xff]
    %v45 = vld [vmem:[%s2 + $0x30] sm:$0x3]
    %47 = vset.pattern.permute.xlu0 0
    %48 = vperm.xlu0 %47, %v39
    %v49 = vpop.permute.xlu0 %48
    %52 = vset.pattern.permute.xlu0 0
    %53 = vperm.xlu0 %52, %v40
    %v54 = vpop.permute.xlu0 %53
    %57 = vset.pattern.permute.xlu0 0
    %58 = vperm.xlu0 %57, %v41
    %v59 = vpop.permute.xlu0 %58
    %62 = vset.pattern.permute.xlu0 0
    %63 = vperm.xlu0 %62, %v42
    %v64 = vpop.permute.xlu0 %63
    %67 = vset.pattern.permute.xlu0 0
    %68 = vperm.xlu0 %67, %v43
    %v69 = vpop.permute.xlu0 %68
    %72 = vset.pattern.permute.xlu0 0
    %73 = vperm.xlu0 %72, %v44
    %v74 = vpop.permute.xlu0 %73
    %77 = vset.pattern.permute.xlu0 0
    %78 = vperm.xlu0 %77, %v45
    %v79 = vpop.permute.xlu0 %78
    %v88 = vunpack.c.l.b16 %v32
    %v89 = vunpack.c.l.b16 %v33
    %v90 = vunpack.c.l.b16 %v34
    %v91 = vunpack.c.l.b16 %v35
    %v92 = vunpack.c.l.b16 %v36
    %v93 = vunpack.c.l.b16 %v37
    %v94 = vunpack.c.l.b16 %v38
    %v95 = vpack.c.b16 %v89, %v88
    %v96 = vpack.c.b16 %v91, %v90
    %v97 = vpack.c.b16 %v93, %v92
    %v98 = vpack.c.b16 %v94, %v94
    %v101 = vunpack.c.l.b16 %v30
    %v102 = vunpack.c.l.b16 %v31
    %v103 = vpack.c.b16 %v102, %v101
    %vm104 = vcmask 105472
    %v106 = vsel %vm104, %v95, 0
    %v109 = vsel %vm104, %v96, 0
    %v112 = vsel %vm104, %v97, 0
    %v115 = vsel %vm104, %v98, 0
    %vm117 = vcmask 1045504
    %vm118 = vcmask 1046528
    %v119 = vsel %vm117, 4294967295, 65535
    %v120 = vsel %vm118, %v119, 0
    %v122 = vand.u32 %v103, %v120
    %124 = vmatprep.subr.bf16.mxu0 0
    %125 = vmatpush1.bf16.msra.mxu0 %v122
    %126 = vmatprep.subr.bf16.mxu0 0
    %127 = vmatpush1.bf16.msra.mxu0 0
    %128 = vmatprep.subr.bf16.mxu0 0
    %129 = vmatpush1.bf16.msra.mxu0 0
    %130 = vmatprep.subr.bf16.mxu0 0
    %131 = vmatpush1.bf16.msra.mxu0 0
    %132 = vmatprep.subr.bf16.mxu0 0
    %133 = vmatpush1.bf16.msra.mxu0 0
    %134 = vmatprep.subr.bf16.mxu0 0
    %135 = vmatpush1.bf16.msra.mxu0 0
    %136 = vmatprep.subr.bf16.mxu0 0
    %137 = vmatpush1.bf16.msra.mxu0 0
    %138 = vmatprep.subr.bf16.mxu0 0
    %139 = vmatpush1.bf16.msra.mxu0 0
    %140 = vmatprep.subr.bf16.mxu0 0
    %141 = vmatpush1.bf16.msra.mxu0 0
    %142 = vmatprep.subr.bf16.mxu0 0
    %143 = vmatpush1.bf16.msra.mxu0 0
    %144 = vmatprep.subr.bf16.mxu0 0
    %145 = vmatpush1.bf16.msra.mxu0 0
    %146 = vmatprep.subr.bf16.mxu0 0
    %147 = vmatpush1.bf16.msra.mxu0 0
    %148 = vmatprep.subr.bf16.mxu0 0
    %149 = vmatpush1.bf16.msra.mxu0 0
    %150 = vmatprep.subr.bf16.mxu0 0
    %151 = vmatpush1.bf16.msra.mxu0 0
    %152 = vmatprep.subr.bf16.mxu0 0
    %153 = vmatpush1.bf16.msra.mxu0 0
    %154 = vmatprep.subr.bf16.mxu0 0
    %155 = vmatpush1.bf16.msra.mxu0 0
    %156 = vmatprep.mubr.bf16.mxu0 0
    %157 = vmatmul.mubr.bf16.gmra.mrb[0].mxu0 %v106
    %v158 = vpop.f32.mrb[0].mxu0
    %v159 = vadd.f32 %v49, %v158
    %v160 = vpop.f32.mrb[0].mxu0
    %v161 = vpop.f32.mrb[0].mxu0
    %v162 = vadd.f32 %v54, %v161
    %v163 = vpop.f32.mrb[0].mxu0
    %164 = vmatprep.mubr.bf16.mxu0 0
    %165 = vmatmul.mubr.bf16.gmra.mrb[0].mxu0 %v109
    %v166 = vpop.f32.mrb[0].mxu0
    %v167 = vadd.f32 %v59, %v166
    %v168 = vpop.f32.mrb[0].mxu0
    %v169 = vpop.f32.mrb[0].mxu0
    %v170 = vadd.f32 %v64, %v169
    %v171 = vpop.f32.mrb[0].mxu0
    %172 = vmatprep.mubr.bf16.mxu0 0
    %173 = vmatmul.mubr.bf16.gmra.mrb[0].mxu0 %v112
    %v174 = vpop.f32.mrb[0].mxu0
    %v175 = vadd.f32 %v69, %v174
    %v176 = vpop.f32.mrb[0].mxu0
    %v177 = vpop.f32.mrb[0].mxu0
    %v178 = vadd.f32 %v74, %v177
    %v179 = vpop.f32.mrb[0].mxu0
    %180 = vmatprep.mubr.bf16.mxu0 0
    %181 = vmatmul.mubr.bf16.gmra.mrb[0].mxu0 %v115
    %v182 = vpop.f32.mrb[0].mxu0
    %v183 = vadd.f32 %v79, %v182
    %v184 = vpop.f32.mrb[0].mxu0
    %v185 = vpop.f32.mrb[0].mxu0
    %v186 = vpop.f32.mrb[0].mxu0
    %187 = vdwg.mxu0
    %v188 = vmax.f32 %v159, 0.0
    %v189 = vmax.f32 %v162, 0.0
    %v190 = vmax.f32 %v167, 0.0
    %v191 = vmax.f32 %v170, 0.0
    %v192 = vmax.f32 %v175, 0.0
    %v193 = vmax.f32 %v178, 0.0
    %v194 = vmax.f32 %v183, 0.0
    %v195 = vld [vmem:[%s3] sm:$0xf]
    %v196 = vld [vmem:[%s3 + $0x4] sm:$0xf]
    %v197 = vld [vmem:[%s3 + $0x8] sm:$0xf]
    %v198 = vld [vmem:[%s3 + $0xc] sm:$0x7]
    %v199 = vpack.c.bf16 %v189, %v188
    %v200 = vpack.c.bf16 %v191, %v190
    %v201 = vpack.c.bf16 %v193, %v192
    %v202 = vpack.c.bf16 %v194, %v194
    %v203 = vld [vmem:[%s4] sm:$0xff]
    %v204 = vld [vmem:[%s4 + $0x8] sm:$0xff]
    %v205 = vld [vmem:[%s4 + $0x10] sm:$0xff]
    %v206 = vld [vmem:[%s4 + $0x18] sm:$0x3f]
    %208 = vset.pattern.permute.xlu0 0
    %209 = vperm.xlu0 %208, %v203
    %v210 = vpop.permute.xlu0 %209
    %213 = vset.pattern.permute.xlu0 0
    %214 = vperm.xlu0 %213, %v204
    %v215 = vpop.permute.xlu0 %214
    %218 = vset.pattern.permute.xlu0 0
    %219 = vperm.xlu0 %218, %v205
    %v220 = vpop.permute.xlu0 %219
    %223 = vset.pattern.permute.xlu0 0
    %224 = vperm.xlu0 %223, %v206
    %v225 = vpop.permute.xlu0 %224
    %v231 = vunpack.c.l.b16 %v195
    %v232 = vunpack.c.l.b16 %v196
    %v233 = vunpack.c.l.b16 %v197
    %v234 = vunpack.c.l.b16 %v198
    %v235 = vpack.c.b16 %v232, %v231
    %v236 = vpack.c.b16 %v234, %v233
    %vm237 = vcmask 408576
    %v239 = vsel %vm237, %v235, 0
    %v242 = vsel %vm237, %v236, 0
    %vm244 = vcmask 1040384
    %v246 = vsel %vm244, %v202, 0
    %248 = vmatprep.subr.bf16.mxu0 0
    %249 = vmatpush1.bf16.msra.mxu0 %v199
    %250 = vmatprep.subr.bf16.mxu0 0
    %251 = vmatpush1.bf16.msra.mxu0 %v200
    %252 = vmatprep.subr.bf16.mxu0 0
    %253 = vmatpush1.bf16.msra.mxu0 %v201
    %254 = vmatprep.subr.bf16.mxu0 0
    %255 = vmatpush1.bf16.msra.mxu0 %v246
    %256 = vmatprep.subr.bf16.mxu0 0
    %257 = vmatpush1.bf16.msra.mxu0 0
    %258 = vmatprep.subr.bf16.mxu0 0
    %259 = vmatpush1.bf16.msra.mxu0 0
    %260 = vmatprep.subr.bf16.mxu0 0
    %261 = vmatpush1.bf16.msra.mxu0 0
    %262 = vmatprep.subr.bf16.mxu0 0
    %263 = vmatpush1.bf16.msra.mxu0 0
    %264 = vmatprep.subr.bf16.mxu0 0
    %265 = vmatpush1.bf16.msra.mxu0 0
    %266 = vmatprep.subr.bf16.mxu0 0
    %267 = vmatpush1.bf16.msra.mxu0 0
    %268 = vmatprep.subr.bf16.mxu0 0
    %269 = vmatpush1.bf16.msra.mxu0 0
    %270 = vmatprep.subr.bf16.mxu0 0
    %271 = vmatpush1.bf16.msra.mxu0 0
    %272 = vmatprep.subr.bf16.mxu0 0
    %273 = vmatpush1.bf16.msra.mxu0 0
    %274 = vmatprep.subr.bf16.mxu0 0
    %275 = vmatpush1.bf16.msra.mxu0 0
    %276 = vmatprep.subr.bf16.mxu0 0
    %277 = vmatpush1.bf16.msra.mxu0 0
    %278 = vmatprep.subr.bf16.mxu0 0
    %279 = vmatpush1.bf16.msra.mxu0 0
    %280 = vmatprep.mubr.bf16.mxu0 0
    %281 = vmatmul.mubr.bf16.gmra.mrb[0].mxu0 %v239
    %v282 = vpop.f32.mrb[0].mxu0
    %v283 = vadd.f32 %v210, %v282
    %v284 = vpop.f32.mrb[0].mxu0
    %v285 = vpop.f32.mrb[0].mxu0
    %v286 = vadd.f32 %v215, %v285
    %v287 = vpop.f32.mrb[0].mxu0
    %288 = vmatprep.mubr.bf16.mxu0 0
    %289 = vmatmul.mubr.bf16.gmra.mrb[0].mxu0 %v242
    %v290 = vpop.f32.mrb[0].mxu0
    %v291 = vadd.f32 %v220, %v290
    %v292 = vpop.f32.mrb[0].mxu0
    %v293 = vpop.f32.mrb[0].mxu0
    %v294 = vadd.f32 %v225, %v293
    %v295 = vpop.f32.mrb[0].mxu0
    %296 = vdwg.mxu0
    %v297 = vmax.f32 %v283, 0.0
    %v298 = vmax.f32 %v286, 0.0
    %v299 = vmax.f32 %v291, 0.0
    %v300 = vmax.f32 %v294, 0.0
    %v301 = vld [vmem:[%s5] sm:$0x1]
    %v302 = vpack.c.bf16 %v298, %v297
    %v303 = vpack.c.bf16 %v300, %v299
    %v304 = vld [vmem:[#allocation2] sm:$0x1]
    %306 = vset.pattern.permute.xlu0 0
    %307 = vperm.xlu0 %306, %v304
    %v308 = vpop.permute.xlu0 %307
    %v310 = vlaneseq
    %v311 = vshrl.u32 %v310, 7
    %v312 = vsub.s32 0, %v311
    %v313 = vrot.slane %v308, %v312
    %vm314 = vcmask 244736
    %v316 = vsel %vm314, %v301, 0
    %v319 = vsel %vm118, %v303, 0
    %321 = vmatprep.subr.bf16.mxu0 0
    %322 = vmatpush1.bf16.msra.mxu0 %v302
    %323 = vmatprep.subr.bf16.mxu0 0
    %324 = vmatpush1.bf16.msra.mxu0 %v319
    %325 = vmatprep.subr.bf16.mxu0 0
    %326 = vmatpush1.bf16.msra.mxu0 0
    %327 = vmatprep.subr.bf16.mxu0 0
    %328 = vmatpush1.bf16.msra.mxu0 0
    %329 = vmatprep.subr.bf16.mxu0 0
    %330 = vmatpush1.bf16.msra.mxu0 0
    %331 = vmatprep.subr.bf16.mxu0 0
    %332 = vmatpush1.bf16.msra.mxu0 0
    %333 = vmatprep.subr.bf16.mxu0 0
    %334 = vmatpush1.bf16.msra.mxu0 0
    %335 = vmatprep.subr.bf16.mxu0 0
    %336 = vmatpush1.bf16.msra.mxu0 0
    %337 = vmatprep.subr.bf16.mxu0 0
    %338 = vmatpush1.bf16.msra.mxu0 0
    %339 = vmatprep.subr.bf16.mxu0 0
    %340 = vmatpush1.bf16.msra.mxu0 0
    %341 = vmatprep.subr.bf16.mxu0 0
    %342 = vmatpush1.bf16.msra.mxu0 0
    %343 = vmatprep.subr.bf16.mxu0 0
    %344 = vmatpush1.bf16.msra.mxu0 0
    %345 = vmatprep.subr.bf16.mxu0 0
    %346 = vmatpush1.bf16.msra.mxu0 0
    %347 = vmatprep.subr.bf16.mxu0 0
    %348 = vmatpush1.bf16.msra.mxu0 0
    %349 = vmatprep.subr.bf16.mxu0 0
    %350 = vmatpush1.bf16.msra.mxu0 0
    %351 = vmatprep.subr.bf16.mxu0 0
    %352 = vmatpush1.bf16.msra.mxu0 0
    %353 = vmatprep.mubr.bf16.mxu0 0
    %354 = vmatmul.mubr.bf16.gmra.mrb[0].mxu0 %v316
    %v355 = vpop.f32.mrb[0].mxu0
    %v356 = vadd.f32 %v313, %v355
    %v357 = vpop.f32.mrb[0].mxu0
    %v358 = vpop.f32.mrb[0].mxu0
    %v359 = vpop.f32.mrb[0].mxu0
    %360 = vdwg.mxu0
    %v361 = vmax.f32 %v356, 0.0
    %362 = vst [vmem:[#allocation3] sm:$0x1] %v361
    // Predicated region
    $region30: #{tpu_custom_call.1} parent=1 // pred_check
      _
    $region31: #{tpu_custom_call.1} parent=1 // pred_check_branch
      %364 = sbr.rel (0) target = $region33
    $region32: #{tpu_custom_call.1} parent=1 // pred_region
      %s366 = ssub.s32 16, 16
      %367 = vsyncadd [#allocation4], %s366
      %s369 = sshll.u32 [#allocation3], 4
      %s370 = int_to_ptr.vmem [resolvable:$true] %s369
      %372 = dma.vmem_to_hbm [thread:$0]  %s370, 16, %s7, [#allocation4]
    $region33: #{tpu_custom_call.1} parent=1 // pred_fallthru
      _
    // Predicated region
    $region34: #{tpu_custom_call.1} parent=1 // pred_check
      _
    $region35: #{tpu_custom_call.1} parent=1 // pred_check_branch
      %374 = sbr.rel (0) target = $region37
    $region36: #{tpu_custom_call.1} parent=1 // pred_region
      %375 = dma.done [#allocation4], 16
    $region37: #{tpu_custom_call.1} parent=1 // pred_fallthru
      _
    %376 = vsyncpa [#allocation4], 1

</llo_original>
